<compile_context>
chip_gen: v5e
topology: v5e:2x2
jax: 0.10.0
libtpu: 0.0.40
codegen_flags: <defaults>
</compile_context>

<pallas_src>
import math
import numpy as np
import jax
import jax.numpy as jnp
from jax.experimental import pallas as pl
from jax.experimental.pallas import tpu as pltpu

# ----------------------------- configuration --------------------------------
LMAX = 3
N_CONV = 3
NEG_SLOPE = 0.01                 # nn.LeakyReLU default
K = (LMAX + 1) ** 2              # number of real-SH coefficients


# ------------------------ host-side glue: SH basis --------------------------
def real_sph_harm_basis(theta, phi, lmax):
    """Real spherical harmonics Y_k(theta, phi), k indexes (l, m), shape [P, K]."""
    theta = np.asarray(theta, dtype=np.float64)
    phi = np.asarray(phi, dtype=np.float64)
    x = np.cos(theta)
    sinth = np.sin(theta)
    P = theta.shape[0]
    Kc = (lmax + 1) ** 2
    Y = np.zeros((P, Kc), dtype=np.float64)

    # associated Legendre P_l^m via standard recurrences
    Plm = {}
    for m in range(lmax + 1):
        pmm = np.ones(P)
        if m > 0:
            fact = 1.0
            for _ in range(m):
                pmm = pmm * (-fact) * sinth
                fact += 2.0
        Plm[(m, m)] = pmm
        if m < lmax:
            Plm[(m + 1, m)] = x * (2 * m + 1) * pmm
        for l in range(m + 2, lmax + 1):
            Plm[(l, m)] = ((2 * l - 1) * x * Plm[(l - 1, m)]
                           - (l + m - 1) * Plm[(l - 2, m)]) / (l - m)

    k = 0
    for l in range(lmax + 1):
        for m in range(-l, l + 1):
            am = abs(m)
            norm = math.sqrt((2 * l + 1) / (4 * math.pi)
                             * math.factorial(l - am) / math.factorial(l + am))
            if m == 0:
                Y[:, k] = norm * Plm[(l, 0)]
            elif m > 0:
                Y[:, k] = math.sqrt(2.0) * norm * Plm[(l, m)] * np.cos(m * phi)
            else:
                Y[:, k] = math.sqrt(2.0) * norm * Plm[(l, am)] * np.sin(am * phi)
            k += 1
    return Y


def l_index_per_coeff(lmax):
    return np.array([l for l in range(lmax + 1) for _ in range(2 * l + 1)],
                    dtype=np.int32)


def _build_bases(theta, phi, area):
    """Forward (area-weighted) and inverse SH bases, quantized to bf16 for I/O."""
    Y = jnp.asarray(real_sph_harm_basis(np.asarray(theta), np.asarray(phi), LMAX),
                    dtype=jnp.float32)                                   # [P, K]
    bfwd = (Y * area[:, None].astype(jnp.float32)).astype(jnp.bfloat16)  # [P, K]
    binv = Y.T.astype(jnp.bfloat16)                                      # [K, P]
    return bfwd, binv


def _choose_batch_tile(B, C, P_pad):
    """Batch elements per grid step (the M dim of every streaming matmul)."""
    # data + out blocks (bf16, double-buffered): 8 * tb * C * P_pad bytes; keep
    # them under ~24 MiB so the default 32 MiB scoped VMEM (and v7x's 64 MiB
    # physical VMEM) always holds blocks + double-buffered constant operands.
    vmem_cap = max(16, (24 * 1024 * 1024) // (8 * C * P_pad))
    cap = min(B, vmem_cap, 256)
    if B >= 32:
        cap = min(cap, (B + 1) // 2)     # >=2 grid steps: both v7x TensorCores busy
    if cap >= B:
        return B                         # single tile: block dims == array dims
    return max(16, (cap // 16) * 16)     # multiple of 16 rows (bf16 sublanes)


def _build_spectral_weights(weights_per_l, C):
    """[N_CONV, C*K, C*K] bf16 block-diagonal-over-coefficient mixing matrices.

    out[b, co*K + k] = sum_ci W[co, ci, l(k)] * in[b, ci*K + k]
    """
    w = np.asarray(weights_per_l, dtype=np.float32)          # [N, Cout, Cin, L+1]
    w_exp = w[:, :, :, l_index_per_coeff(LMAX)]              # [N, Cout, Cin, K]
    wbig = np.zeros((w.shape[0], C * K, C * K), dtype=np.float32)
    ar = np.arange(K)
    for n in range(w.shape[0]):
        for co in range(C):
            for ci in range(C):
                wbig[n, ci * K + ar, co * K + ar] = w_exp[n, co, ci, :]
    return jnp.asarray(wbig, dtype=jnp.bfloat16)


# ------------------------------ Pallas kernel --------------------------------
def spherical_conv_block_kernel(data_ref, bfwd_ref, binv_ref, w_ref, out_ref):
    """One tile of TB batch elements per grid step.

    data_ref : [TB, C*P]            bf16  flattened sphere data (channel-major)
    bfwd_ref : [P, K]               bf16  forward basis (area[p] * Y_k(p))
    binv_ref : [K, P]               bf16  inverse basis (Y_k(p))
    w_ref    : [N_CONV, C*K, C*K]   bf16  block-diag-over-coefficient channel mix
    out_ref  : [TB, C*P]            bf16
    """
    P, Kc = bfwd_ref.shape
    C = data_ref.shape[1] // P
    n_conv = w_ref.shape[0]

    # SphericalFT: one bf16 MXU matmul per channel (f32 accumulation),
    # lane-packed into the [TB, C*K] spectral state.
    bfwd = bfwd_ref[...]
    sdata = jnp.concatenate(
        [jnp.dot(data_ref[:, c * P:(c + 1) * P], bfwd,
                 preferred_element_type=jnp.float32) for c in range(C)],
        axis=1)                                               # [TB, C*K] f32
    skip = sdata

    # N_CONV SphericalConvSpectral layers: one bf16 matmul per layer against a
    # block-diagonal-over-coefficient weight, then LeakyReLU (chain kept in f32).
    for n in range(n_conv):
        mixed = jnp.dot(sdata.astype(jnp.bfloat16), w_ref[n],
                        preferred_element_type=jnp.float32)
        sdata = jnp.where(mixed > 0, mixed, NEG_SLOPE * mixed)

    # residual / skip connection; single cast for the ISFT operands
    sdata = (sdata + skip).astype(jnp.bfloat16)

    # InverseSphericalFT per channel: lane-dense [TB, P] stores (P % 128 == 0).
    binv = binv_ref[...]
    for c in range(C):
        out_ref[:, c * P:(c + 1) * P] = jnp.dot(
            sdata[:, c * Kc:(c + 1) * Kc], binv,
            preferred_element_type=jnp.float32).astype(out_ref.dtype)


# ------------------------------- wrapper -------------------------------------
def spherical_conv_block(theta, phi, area, data, weights_per_l):
    """theta, phi, area: [P]; data: [B, C, P] f32;
    weights_per_l: [N_CONV, C, C, LMAX+1].

    Returns [B, C, P] in bfloat16 (I/O kept in bf16; all accumulation is f32).
    """
    B, C, P = data.shape
    P_pad = -(-P // 128) * 128                               # lane-dense sphere dim

    bfwd, binv = _build_bases(theta, phi, area)              # bf16 [P,K], [K,P]
    if P_pad != P:
        bfwd = jnp.pad(bfwd, ((0, P_pad - P), (0, 0)))
        binv = jnp.pad(binv, ((0, 0), (0, P_pad - P)))

    wbig = _build_spectral_weights(weights_per_l, C)         # bf16 [N, C*K, C*K]

    tb = _choose_batch_tile(B, C, P_pad)
    n_tiles = -(-B // tb)
    B_pad = n_tiles * tb

    d = data.astype(jnp.bfloat16)
    if P_pad != P:
        d = jnp.pad(d, ((0, 0), (0, 0), (0, P_pad - P)))
    data2 = d.reshape(B, C * P_pad)
    if B_pad != B:                                           # never split a sample
        data2 = jnp.pad(data2, ((0, B_pad - B), (0, 0)))

    grid_spec = pltpu.PrefetchScalarGridSpec(
        num_scalar_prefetch=0,
        grid=(n_tiles,),
        in_specs=[
            pl.BlockSpec((tb, C * P_pad), lambda t: (t, 0)),            # data tile
            pl.BlockSpec((P_pad, K), lambda t: (0, 0)),                 # fwd basis
            pl.BlockSpec((K, P_pad), lambda t: (0, 0)),                 # inv basis
            pl.BlockSpec((N_CONV, C * K, C * K), lambda t: (0, 0, 0)),  # mix weights
        ],
        out_specs=pl.BlockSpec((tb, C * P_pad), lambda t: (t, 0)),
    )

    out2 = pl.pallas_call(
        spherical_conv_block_kernel,
        out_shape=jax.ShapeDtypeStruct((B_pad, C * P_pad), jnp.bfloat16),
        grid_spec=grid_spec,
        compiler_params=pltpu.CompilerParams(
            dimension_semantics=("parallel",),
            vmem_limit_bytes=32 * 1024 * 1024),
    )(data2, bfwd, binv, wbig)

    out = out2[:B].reshape(B, C, P_pad)
    return out[:, :, :P] if P_pad != P else out


# --------------------------- pure-JAX reference -------------------------------
def reference_forward(theta, phi, area, data, weights_per_l):
    """Pure-JAX reference mirroring the kernel's bf16 quantization points
    (inputs, bases, weights, per-layer matmul operands, pre-ISFT cast) so the
    comparison is tight; all accumulation stays in f32."""
    bfwd, binv = _build_bases(theta, phi, area)
    bfwd = bfwd.astype(jnp.float32)
    binv = binv.astype(jnp.float32)
    d = data.astype(jnp.bfloat16).astype(jnp.float32)

    l_idx = jnp.asarray(l_index_per_coeff(LMAX))
    w_exp = weights_per_l[:, :, :, l_idx].astype(jnp.bfloat16).astype(jnp.float32)

    hi = jax.lax.Precision.HIGHEST
    sdata = jnp.einsum('bcp,pk->bck', d, bfwd, precision=hi)
    skip = sdata
    for n in range(N_CONV):
        s_in = sdata.astype(jnp.bfloat16).astype(jnp.float32)   # mirror operand cast
        sdata = jnp.einsum('ock,bck->bok', w_exp[n], s_in, precision=hi)
        sdata = jnp.where(sdata > 0, sdata, NEG_SLOPE * sdata)
    sdata = (sdata + skip).astype(jnp.bfloat16).astype(jnp.float32)  # mirror pre-ISFT
    return jnp.einsum('bck,kp->bcp', sdata, binv, precision=hi)


# ---------------------------------- main --------------------------------------
if __name__ == "__main__":
    B, C = 2, 4
    nlat, nlon = 8, 16
    P = nlat * nlon  # 128 sphere points

    # equiangular-ish sphere grid + quadrature areas
    th = (np.arange(nlat) + 0.5) * math.pi / nlat
    ph = np.arange(nlon) * 2.0 * math.pi / nlon
    theta_np = np.repeat(th, nlon)                 # [P]
    phi_np = np.tile(ph, nlat)                     # [P]
    area_np = np.sin(theta_np) * (math.pi / nlat) * (2.0 * math.pi / nlon)

    theta = jnp.asarray(theta_np, dtype=jnp.float32)
    phi = jnp.asarray(phi_np, dtype=jnp.float32)
    area = jnp.asarray(area_np, dtype=jnp.float32)

    key = jax.random.PRNGKey(0)
    k_data, k_w = jax.random.split(key)
    data = jax.random.normal(k_data, (B, C, P), dtype=jnp.float32)

    # SphericalConvSpectral weights: one [C_out, C_in] mixing matrix per degree l,
    # per layer -> [N_CONV, C, C, LMAX+1], deterministic init.
    weights_per_l = jax.random.normal(
        k_w, (N_CONV, C, C, LMAX + 1), dtype=jnp.float32) * (1.0 / math.sqrt(C))

    out = spherical_conv_block(theta, phi, area, data, weights_per_l)
    out = jax.block_until_ready(out)

    ref = jax.block_until_ready(
        reference_forward(theta, phi, area, data, weights_per_l))

    assert out.shape == (B, C, P), out.shape

    out_f = np.asarray(out.astype(jnp.float32))
    ref_f = np.asarray(ref)
    scale = float(np.max(np.abs(ref_f)))
    err = float(np.max(np.abs(out_f - ref_f)))
    # bf16 I/O + bf16 matmul operands + bf16 output cast; accumulation is f32 on
    # both paths, so logic bugs would show up at O(scale), not O(1%).
    assert err <= 2e-2 * scale + 1e-3, f"max abs err {err} vs scale {scale}"
    print("KERNEL_OK")
</pallas_src>

<mosaic_0001>
module attributes {stable_mosaic.version = 11 : i64} {
  func.func @spherical_conv_block_kernel(%arg0: i32, %arg1: memref<2x512xbf16, #tpu.memory_space<vmem>>, %arg2: memref<128x16xbf16, #tpu.memory_space<vmem>>, %arg3: memref<16x128xbf16, #tpu.memory_space<vmem>>, %arg4: memref<3x64x64xbf16, #tpu.memory_space<vmem>>, %arg5: memref<2x512xbf16, #tpu.memory_space<vmem>>) attributes {dimension_semantics = [#tpu.dimension_semantics<parallel>], iteration_bounds = array<i64: 1>, scalar_prefetch = 0 : i64, scratch_operands = 0 : i64, tpu.core_type = #tpu.core_type<tc>, window_params = [{transform_indices = @transform_0, window_bounds = array<i64: 2, 512>}, {pipeline_mode = #tpu.pipeline_mode<synchronous>, transform_indices = @transform_1, window_bounds = array<i64: 128, 16>}, {pipeline_mode = #tpu.pipeline_mode<synchronous>, transform_indices = @transform_2, window_bounds = array<i64: 16, 128>}, {pipeline_mode = #tpu.pipeline_mode<synchronous>, transform_indices = @transform_3, window_bounds = array<i64: 3, 64, 64>}, {transform_indices = @transform_4, window_bounds = array<i64: 2, 512>}]} {
    %c0 = arith.constant 0 : index
    %c0_0 = arith.constant 0 : index
    %0 = vector.load %arg2[%c0, %c0_0] : memref<128x16xbf16, #tpu.memory_space<vmem>>, vector<128x16xbf16>
    %c0_1 = arith.constant 0 : index
    %c0_2 = arith.constant 0 : index
    %1 = vector.load %arg1[%c0_1, %c0_2] : memref<2x512xbf16, #tpu.memory_space<vmem>>, vector<2x128xbf16>
    %cst = arith.constant dense<0.000000e+00> : vector<2x16xf32>
    %2 = tpu.matmul %1, %0, %cst {dimension_numbers = #tpu.dot_dimension_numbers<[1], [0], [0], [1], [0, 0, 1, 1], [], []>} : vector<2x128xbf16>, vector<128x16xbf16>, vector<2x16xf32> -> vector<2x16xf32>
    %c0_3 = arith.constant 0 : index
    %c128 = arith.constant 128 : index
    %3 = vector.load %arg1[%c0_3, %c128] : memref<2x512xbf16, #tpu.memory_space<vmem>>, vector<2x128xbf16>
    %cst_4 = arith.constant dense<0.000000e+00> : vector<2x16xf32>
    %4 = tpu.matmul %3, %0, %cst_4 {dimension_numbers = #tpu.dot_dimension_numbers<[1], [0], [0], [1], [0, 0, 1, 1], [], []>} : vector<2x128xbf16>, vector<128x16xbf16>, vector<2x16xf32> -> vector<2x16xf32>
    %c0_5 = arith.constant 0 : index
    %c256 = arith.constant 256 : index
    %5 = vector.load %arg1[%c0_5, %c256] : memref<2x512xbf16, #tpu.memory_space<vmem>>, vector<2x128xbf16>
    %cst_6 = arith.constant dense<0.000000e+00> : vector<2x16xf32>
    %6 = tpu.matmul %5, %0, %cst_6 {dimension_numbers = #tpu.dot_dimension_numbers<[1], [0], [0], [1], [0, 0, 1, 1], [], []>} : vector<2x128xbf16>, vector<128x16xbf16>, vector<2x16xf32> -> vector<2x16xf32>
    %c0_7 = arith.constant 0 : index
    %c384 = arith.constant 384 : index
    %7 = vector.load %arg1[%c0_7, %c384] : memref<2x512xbf16, #tpu.memory_space<vmem>>, vector<2x128xbf16>
    %cst_8 = arith.constant dense<0.000000e+00> : vector<2x16xf32>
    %8 = tpu.matmul %7, %0, %cst_8 {dimension_numbers = #tpu.dot_dimension_numbers<[1], [0], [0], [1], [0, 0, 1, 1], [], []>} : vector<2x128xbf16>, vector<128x16xbf16>, vector<2x16xf32> -> vector<2x16xf32>
    %9 = tpu.concatenate %2, %4, %6, %8 in 1 : vector<2x16xf32>, vector<2x16xf32>, vector<2x16xf32>, vector<2x16xf32> -> vector<2x64xf32>
    %10 = arith.truncf %9 : vector<2x64xf32> to vector<2x64xbf16>
    %c0_9 = arith.constant 0 : index
    %c0_10 = arith.constant 0 : index
    %c0_11 = arith.constant 0 : index
    %11 = vector.load %arg4[%c0_9, %c0_10, %c0_11] : memref<3x64x64xbf16, #tpu.memory_space<vmem>>, vector<1x64x64xbf16>
    %12 = vector.shape_cast %11 : vector<1x64x64xbf16> to vector<64x64xbf16>
    %cst_12 = arith.constant dense<0.000000e+00> : vector<2x64xf32>
    %13 = tpu.matmul %10, %12, %cst_12 {dimension_numbers = #tpu.dot_dimension_numbers<[1], [0], [0], [1], [0, 0, 1, 1], [], []>} : vector<2x64xbf16>, vector<64x64xbf16>, vector<2x64xf32> -> vector<2x64xf32>
    %cst_13 = arith.constant 0.000000e+00 : f32
    %14 = vector.broadcast %cst_13 : f32 to vector<2x64xf32>
    %15 = arith.cmpf ogt, %13, %14 : vector<2x64xf32>
    %cst_14 = arith.constant 0.00999999977 : f32
    %16 = vector.broadcast %cst_14 : f32 to vector<2x64xf32>
    %17 = arith.mulf %16, %13 : vector<2x64xf32>
    %18 = arith.select %15, %13, %17 : vector<2x64xi1>, vector<2x64xf32>
    %19 = arith.truncf %18 : vector<2x64xf32> to vector<2x64xbf16>
    %c1 = arith.constant 1 : index
    %c0_15 = arith.constant 0 : index
    %c0_16 = arith.constant 0 : index
    %20 = vector.load %arg4[%c1, %c0_15, %c0_16] : memref<3x64x64xbf16, #tpu.memory_space<vmem>>, vector<1x64x64xbf16>
    %21 = vector.shape_cast %20 : vector<1x64x64xbf16> to vector<64x64xbf16>
    %cst_17 = arith.constant dense<0.000000e+00> : vector<2x64xf32>
    %22 = tpu.matmul %19, %21, %cst_17 {dimension_numbers = #tpu.dot_dimension_numbers<[1], [0], [0], [1], [0, 0, 1, 1], [], []>} : vector<2x64xbf16>, vector<64x64xbf16>, vector<2x64xf32> -> vector<2x64xf32>
    %cst_18 = arith.constant 0.000000e+00 : f32
    %23 = vector.broadcast %cst_18 : f32 to vector<2x64xf32>
    %24 = arith.cmpf ogt, %22, %23 : vector<2x64xf32>
    %cst_19 = arith.constant 0.00999999977 : f32
    %25 = vector.broadcast %cst_19 : f32 to vector<2x64xf32>
    %26 = arith.mulf %25, %22 : vector<2x64xf32>
    %27 = arith.select %24, %22, %26 : vector<2x64xi1>, vector<2x64xf32>
    %28 = arith.truncf %27 : vector<2x64xf32> to vector<2x64xbf16>
    %c2 = arith.constant 2 : index
    %c0_20 = arith.constant 0 : index
    %c0_21 = arith.constant 0 : index
    %29 = vector.load %arg4[%c2, %c0_20, %c0_21] : memref<3x64x64xbf16, #tpu.memory_space<vmem>>, vector<1x64x64xbf16>
    %30 = vector.shape_cast %29 : vector<1x64x64xbf16> to vector<64x64xbf16>
    %cst_22 = arith.constant dense<0.000000e+00> : vector<2x64xf32>
    %31 = tpu.matmul %28, %30, %cst_22 {dimension_numbers = #tpu.dot_dimension_numbers<[1], [0], [0], [1], [0, 0, 1, 1], [], []>} : vector<2x64xbf16>, vector<64x64xbf16>, vector<2x64xf32> -> vector<2x64xf32>
    %cst_23 = arith.constant 0.000000e+00 : f32
    %32 = vector.broadcast %cst_23 : f32 to vector<2x64xf32>
    %33 = arith.cmpf ogt, %31, %32 : vector<2x64xf32>
    %cst_24 = arith.constant 0.00999999977 : f32
    %34 = vector.broadcast %cst_24 : f32 to vector<2x64xf32>
    %35 = arith.mulf %34, %31 : vector<2x64xf32>
    %36 = arith.select %33, %31, %35 : vector<2x64xi1>, vector<2x64xf32>
    %37 = arith.addf %36, %9 : vector<2x64xf32>
    %38 = arith.truncf %37 : vector<2x64xf32> to vector<2x64xbf16>
    %c0_25 = arith.constant 0 : index
    %c0_26 = arith.constant 0 : index
    %39 = vector.load %arg3[%c0_25, %c0_26] : memref<16x128xbf16, #tpu.memory_space<vmem>>, vector<16x128xbf16>
    %40 = vector.extract_strided_slice %38 {offsets = [0, 0], sizes = [2, 16], strides = [1, 1]} : vector<2x64xbf16> to vector<2x16xbf16>
    %cst_27 = arith.constant dense<0.000000e+00> : vector<2x128xf32>
    %41 = tpu.matmul %40, %39, %cst_27 {dimension_numbers = #tpu.dot_dimension_numbers<[1], [0], [0], [1], [0, 0, 1, 1], [], []>} : vector<2x16xbf16>, vector<16x128xbf16>, vector<2x128xf32> -> vector<2x128xf32>
    %42 = arith.truncf %41 : vector<2x128xf32> to vector<2x128xbf16>
    %c0_28 = arith.constant 0 : index
    %c0_29 = arith.constant 0 : index
    %43 = vector.load %arg5[%c0_28, %c0_29] : memref<2x512xbf16, #tpu.memory_space<vmem>>, vector<2x128xbf16>
    tpu.vector_store %arg5[%c0_28, %c0_29], %42 {strides = array<i32>} : memref<2x512xbf16, #tpu.memory_space<vmem>>, vector<2x128xbf16>,
    %44 = vector.extract_strided_slice %38 {offsets = [0, 16], sizes = [2, 16], strides = [1, 1]} : vector<2x64xbf16> to vector<2x16xbf16>
    %cst_30 = arith.constant dense<0.000000e+00> : vector<2x128xf32>
    %45 = tpu.matmul %44, %39, %cst_30 {dimension_numbers = #tpu.dot_dimension_numbers<[1], [0], [0], [1], [0, 0, 1, 1], [], []>} : vector<2x16xbf16>, vector<16x128xbf16>, vector<2x128xf32> -> vector<2x128xf32>
    %46 = arith.truncf %45 : vector<2x128xf32> to vector<2x128xbf16>
    %c0_31 = arith.constant 0 : index
    %c128_32 = arith.constant 128 : index
    %47 = vector.load %arg5[%c0_31, %c128_32] : memref<2x512xbf16, #tpu.memory_space<vmem>>, vector<2x128xbf16>
    tpu.vector_store %arg5[%c0_31, %c128_32], %46 {strides = array<i32>} : memref<2x512xbf16, #tpu.memory_space<vmem>>, vector<2x128xbf16>,
    %48 = vector.extract_strided_slice %38 {offsets = [0, 32], sizes = [2, 16], strides = [1, 1]} : vector<2x64xbf16> to vector<2x16xbf16>
    %cst_33 = arith.constant dense<0.000000e+00> : vector<2x128xf32>
    %49 = tpu.matmul %48, %39, %cst_33 {dimension_numbers = #tpu.dot_dimension_numbers<[1], [0], [0], [1], [0, 0, 1, 1], [], []>} : vector<2x16xbf16>, vector<16x128xbf16>, vector<2x128xf32> -> vector<2x128xf32>
    %50 = arith.truncf %49 : vector<2x128xf32> to vector<2x128xbf16>
    %c0_34 = arith.constant 0 : index
    %c256_35 = arith.constant 256 : index
    %51 = vector.load %arg5[%c0_34, %c256_35] : memref<2x512xbf16, #tpu.memory_space<vmem>>, vector<2x128xbf16>
    tpu.vector_store %arg5[%c0_34, %c256_35], %50 {strides = array<i32>} : memref<2x512xbf16, #tpu.memory_space<vmem>>, vector<2x128xbf16>,
    %52 = vector.extract_strided_slice %38 {offsets = [0, 48], sizes = [2, 16], strides = [1, 1]} : vector<2x64xbf16> to vector<2x16xbf16>
    %cst_36 = arith.constant dense<0.000000e+00> : vector<2x128xf32>
    %53 = tpu.matmul %52, %39, %cst_36 {dimension_numbers = #tpu.dot_dimension_numbers<[1], [0], [0], [1], [0, 0, 1, 1], [], []>} : vector<2x16xbf16>, vector<16x128xbf16>, vector<2x128xf32> -> vector<2x128xf32>
    %54 = arith.truncf %53 : vector<2x128xf32> to vector<2x128xbf16>
    %c0_37 = arith.constant 0 : index
    %c384_38 = arith.constant 384 : index
    %55 = vector.load %arg5[%c0_37, %c384_38] : memref<2x512xbf16, #tpu.memory_space<vmem>>, vector<2x128xbf16>
    tpu.vector_store %arg5[%c0_37, %c384_38], %54 {strides = array<i32>} : memref<2x512xbf16, #tpu.memory_space<vmem>>, vector<2x128xbf16>,
    return
  }
  func.func @transform_0(%arg0: i32) -> (i32, i32) {
    %c0_i32 = arith.constant 0 : i32
    %c0_i32_0 = arith.constant 0 : i32
    return %arg0, %c0_i32 : i32, i32
  }
  func.func @transform_1(%arg0: i32) -> (i32, i32) {
    %c0_i32 = arith.constant 0 : i32
    %c0_i32_0 = arith.constant 0 : i32
    %c0_i32_1 = arith.constant 0 : i32
    return %c0_i32, %c0_i32_0 : i32, i32
  }
  func.func @transform_2(%arg0: i32) -> (i32, i32) {
    %c0_i32 = arith.constant 0 : i32
    %c0_i32_0 = arith.constant 0 : i32
    %c0_i32_1 = arith.constant 0 : i32
    return %c0_i32, %c0_i32_0 : i32, i32
  }
  func.func @transform_3(%arg0: i32) -> (i32, i32, i32) {
    %c0_i32 = arith.constant 0 : i32
    %c0_i32_0 = arith.constant 0 : i32
    %c0_i32_1 = arith.constant 0 : i32
    %c0_i32_2 = arith.constant 0 : i32
    return %c0_i32, %c0_i32_0, %c0_i32_1 : i32, i32, i32
  }
  func.func @transform_4(%arg0: i32) -> (i32, i32) {
    %c0_i32 = arith.constant 0 : i32
    %c0_i32_0 = arith.constant 0 : i32
    return %arg0, %c0_i32 : i32, i32
  }
}

</mosaic_0001>

<llo_original>
// kernel: tpu_custom_call.1
$region0: #{tpu_custom_call.1}
  #allocation0 [shape = 'u32[]', space=smem, size = 0x4, offset = 0x4, fixed_abs, tag = 'smem constant byte address 0x4 - core index']
  #allocation1 [shape = 'u32[72,128]{1,0:T(1,128)}', space=vmem, size = 0x9000, scoped, tag = 'internal scratch']
  %s0 = inlined_call_operand.vmem [shape: bf16[2,512], index: 0, kind: input, shape index: {}]
  %s1 = inlined_call_operand.vmem [shape: bf16[128,16], index: 1, kind: input, shape index: {}]
  %s2 = inlined_call_operand.vmem [shape: bf16[16,128], index: 2, kind: input, shape index: {}]
  %s3 = inlined_call_operand.hbm [shape: bf16[3,64,64], index: 3, kind: input, shape index: {}]
  %s4 = inlined_call_operand.hbm [shape: bf16[2,512], index: 4, kind: output, shape index: {}]
  %s5 = sld [smem:[#allocation0]]
  $region30: #{tpu_custom_call.1} parent=0
    _
  %s7 = ssub.s32 1, %s5
  %s8 = scalar_select 0, %s7, %s5
  $region1: #{tpu_custom_call.1} parent=0
    #allocation2 [shape = 'u8[49152]{0}', space=vmem, size = 0xc000, scoped, tag = 'input window, operand 3, single buffered']
    #allocation3 [shape = 's32[1]{0}', space=sflag, size = 0x4, scoped, tag = 'scoped memory for tpu_custom_call.1']
    #allocation4 [shape = 's32[1]{0}', space=sflag, size = 0x4, scoped, tag = 'scoped memory for tpu_custom_call.1']
    #allocation5 [shape = 'u8[2048]{0}', space=vmem, size = 0x800, scoped, tag = 'output window, operand 0, single buffered']
    %9 = vsyncpa [#allocation3], 0
    %10 = vsyncpa [#allocation4], 0
    // Predicated region
    $region2: #{tpu_custom_call.1} parent=1 // pred_check
      _
    $region3: #{tpu_custom_call.1} parent=1 // pred_check_branch
      %12 = sbr.rel (0) target = $region5
    $region4: #{tpu_custom_call.1} parent=1 // pred_region
      _
    $region5: #{tpu_custom_call.1} parent=1 // pred_fallthru
      _
    // Predicated region
    $region6: #{tpu_custom_call.1} parent=1 // pred_check
      _
    $region7: #{tpu_custom_call.1} parent=1 // pred_check_branch
      %14 = sbr.rel (0) target = $region9
    $region8: #{tpu_custom_call.1} parent=1 // pred_region
      _
    $region9: #{tpu_custom_call.1} parent=1 // pred_fallthru
      _
    // Predicated region
    $region10: #{tpu_custom_call.1} parent=1 // pred_check
      _
    $region11: #{tpu_custom_call.1} parent=1 // pred_check_branch
      %16 = sbr.rel (0) target = $region13
    $region12: #{tpu_custom_call.1} parent=1 // pred_region
      _
    $region13: #{tpu_custom_call.1} parent=1 // pred_fallthru
      _
    // Predicated region
    $region14: #{tpu_custom_call.1} parent=1 // pred_check
      _
    $region15: #{tpu_custom_call.1} parent=1 // pred_check_branch
      %18 = sbr.rel (0) target = $region17
    $region16: #{tpu_custom_call.1} parent=1 // pred_region
      %20 = vsyncadd [#allocation3], 0
      %s21 = sshll.u32 %s3, 4
      %s22 = int_to_ptr.hbm [resolvable:$true] %s21
      %s23 = sshll.u32 [#allocation2], 4
      %s24 = int_to_ptr.vmem [resolvable:$true] %s23
      %29 = dma.hbm_to_vmem [thread:$0]  %s22, 1536, %s24, [#allocation3], 64, 64, 4
    $region17: #{tpu_custom_call.1} parent=1 // pred_fallthru
      _
    // Predicated region
    $region18: #{tpu_custom_call.1} parent=1 // pred_check
      _
    $region19: #{tpu_custom_call.1} parent=1 // pred_check_branch
      %31 = sbr.rel (0) target = $region21
    $region20: #{tpu_custom_call.1} parent=1 // pred_region
      %33 = dma.done [#allocation3], 1536
    $region21: #{tpu_custom_call.1} parent=1 // pred_fallthru
      _
    %v35 = vld [vmem:[%s1] sm:$0xf]
    %v36 = vld [vmem:[%s1 + $0x4] sm:$0xf]
    %v37 = vld [vmem:[%s1 + $0x8] sm:$0xf]
    %v38 = vld [vmem:[%s1 + $0xc] sm:$0xf]
    %v39 = vld [vmem:[%s1 + $0x10] sm:$0xf]
    %v40 = vld [vmem:[%s1 + $0x14] sm:$0xf]
    %v41 = vld [vmem:[%s1 + $0x18] sm:$0xf]
    %v42 = vld [vmem:[%s1 + $0x1c] sm:$0xf]
    %v43 = vld [vmem:[%s1 + $0x20] sm:$0xf]
    %v44 = vld [vmem:[%s1 + $0x24] sm:$0xf]
    %v45 = vld [vmem:[%s1 + $0x28] sm:$0xf]
    %v46 = vld [vmem:[%s1 + $0x2c] sm:$0xf]
    %v47 = vld [vmem:[%s1 + $0x30] sm:$0xf]
    %v48 = vld [vmem:[%s1 + $0x34] sm:$0xf]
    %v49 = vld [vmem:[%s1 + $0x38] sm:$0xf]
    %v50 = vld [vmem:[%s1 + $0x3c] sm:$0xf]
    %v51 = vld [vmem:[%s0] sm:$0x1]
    %v68 = vunpack.c.l.b16 %v35
    %v69 = vunpack.c.l.b16 %v36
    %v70 = vunpack.c.l.b16 %v37
    %v71 = vunpack.c.l.b16 %v38
    %v72 = vunpack.c.l.b16 %v39
    %v73 = vunpack.c.l.b16 %v40
    %v74 = vunpack.c.l.b16 %v41
    %v75 = vunpack.c.l.b16 %v42
    %v76 = vunpack.c.l.b16 %v43
    %v77 = vunpack.c.l.b16 %v44
    %v78 = vunpack.c.l.b16 %v45
    %v79 = vunpack.c.l.b16 %v46
    %v80 = vunpack.c.l.b16 %v47
    %v81 = vunpack.c.l.b16 %v48
    %v82 = vunpack.c.l.b16 %v49
    %v83 = vunpack.c.l.b16 %v50
    %v84 = vpack.c.b16 %v69, %v68
    %v85 = vpack.c.b16 %v71, %v70
    %v86 = vpack.c.b16 %v73, %v72
    %v87 = vpack.c.b16 %v75, %v74
    %v88 = vpack.c.b16 %v77, %v76
    %v89 = vpack.c.b16 %v79, %v78
    %v90 = vpack.c.b16 %v81, %v80
    %v91 = vpack.c.b16 %v83, %v82
    %100 = vmatpush.bf16.msra.mxu0 %v91
    %101 = vmatpush.bf16.msra.mxu0 %v90
    %102 = vmatpush.bf16.msra.mxu0 %v89
    %103 = vmatpush.bf16.msra.mxu0 %v88
    %104 = vmatpush.bf16.msra.mxu0 %v87
    %105 = vmatpush.bf16.msra.mxu0 %v86
    %106 = vmatpush.bf16.msra.mxu0 %v85
    %107 = vmatpush.bf16.msra.mxu0 %v84
    %108 = vmatmul.bf16.gmra.mxu0 %v51
    %v109 = vpop.f32.mrf.mxu0
    %v110 = vadd.f32 0.0, %v109
    %v111 = vpop.f32.mrf.mxu0
    %112 = vdwg.mxu0
    %v113 = vld [vmem:[%s0 + $0x1] sm:$0x1]
    %114 = vmatpush.bf16.msra.mxu0 %v91
    %115 = vmatpush.bf16.msra.mxu0 %v90
    %116 = vmatpush.bf16.msra.mxu0 %v89
    %117 = vmatpush.bf16.msra.mxu0 %v88
    %118 = vmatpush.bf16.msra.mxu0 %v87
    %119 = vmatpush.bf16.msra.mxu0 %v86
    %120 = vmatpush.bf16.msra.mxu0 %v85
    %121 = vmatpush.bf16.msra.mxu0 %v84
    %122 = vmatmul.bf16.gmra.mxu0 %v113
    %v123 = vpop.f32.mrf.mxu0
    %v124 = vadd.f32 0.0, %v123
    %v125 = vpop.f32.mrf.mxu0
    %126 = vdwg.mxu0
    %v127 = vld [vmem:[%s0 + $0x2] sm:$0x1]
    %128 = vmatpush.bf16.msra.mxu0 %v91
    %129 = vmatpush.bf16.msra.mxu0 %v90
    %130 = vmatpush.bf16.msra.mxu0 %v89
    %131 = vmatpush.bf16.msra.mxu0 %v88
    %132 = vmatpush.bf16.msra.mxu0 %v87
    %133 = vmatpush.bf16.msra.mxu0 %v86
    %134 = vmatpush.bf16.msra.mxu0 %v85
    %135 = vmatpush.bf16.msra.mxu0 %v84
    %136 = vmatmul.bf16.gmra.mxu0 %v127
    %v137 = vpop.f32.mrf.mxu0
    %v138 = vadd.f32 0.0, %v137
    %v139 = vpop.f32.mrf.mxu0
    %140 = vdwg.mxu0
    %v141 = vld [vmem:[%s0 + $0x3] sm:$0x1]
    %142 = vmatpush.bf16.msra.mxu0 %v91
    %143 = vmatpush.bf16.msra.mxu0 %v90
    %144 = vmatpush.bf16.msra.mxu0 %v89
    %145 = vmatpush.bf16.msra.mxu0 %v88
    %146 = vmatpush.bf16.msra.mxu0 %v87
    %147 = vmatpush.bf16.msra.mxu0 %v86
    %148 = vmatpush.bf16.msra.mxu0 %v85
    %149 = vmatpush.bf16.msra.mxu0 %v84
    %150 = vmatmul.bf16.gmra.mxu0 %v141
    %v151 = vpop.f32.mrf.mxu0
    %v152 = vadd.f32 0.0, %v151
    %v153 = vpop.f32.mrf.mxu0
    %154 = vdwg.mxu0
    %156 = vrot.lane.b32.xlu0 %v124, 16
    %v157 = vpop.permute.xlu0 %156
    %160 = vrot.lane.b32.xlu0 %v138, 32
    %v161 = vpop.permute.xlu0 %160
    %164 = vrot.lane.b32.xlu0 %v152, 48
    %v165 = vpop.permute.xlu0 %164
    %vm167 = vcmask 130048
    %v168 = vsel %vm167, %v110, %v157
    %vm169 = vcmask 261120
    %v170 = vsel %vm169, %v168, %v161
    %vm171 = vcmask 392192
    %v172 = vsel %vm171, %v170, %v165
    %v173 = vpack.c.bf16 %v172, %v172
    %v174 = vld [vmem:[#allocation2] sm:$0xf]
    %v175 = vld [vmem:[#allocation2 + $0x4] sm:$0xf]
    %v176 = vld [vmem:[#allocation2 + $0x8] sm:$0xf]
    %v177 = vld [vmem:[#allocation2 + $0xc] sm:$0xf]
    %v178 = vld [vmem:[#allocation2 + $0x10] sm:$0xf]
    %v179 = vld [vmem:[#allocation2 + $0x14] sm:$0xf]
    %v180 = vld [vmem:[#allocation2 + $0x18] sm:$0xf]
    %v181 = vld [vmem:[#allocation2 + $0x1c] sm:$0xf]
    %v190 = vunpack.c.l.b16 %v174
    %v191 = vunpack.c.l.b16 %v175
    %v192 = vunpack.c.l.b16 %v176
    %v193 = vunpack.c.l.b16 %v177
    %v194 = vunpack.c.l.b16 %v178
    %v195 = vunpack.c.l.b16 %v179
    %v196 = vunpack.c.l.b16 %v180
    %v197 = vunpack.c.l.b16 %v181
    %v198 = vpack.c.b16 %v191, %v190
    %v199 = vpack.c.b16 %v193, %v192
    %v200 = vpack.c.b16 %v195, %v194
    %v201 = vpack.c.b16 %v197, %v196
    %vm206 = vcmask 523264
    %v208 = vsel %vm206, %v173, 0
    %210 = vmatpush.bf16.msra.mxu0 0
    %211 = vmatpush.bf16.msra.mxu0 0
    %212 = vmatpush.bf16.msra.mxu0 0
    %213 = vmatpush.bf16.msra.mxu0 0
    %214 = vmatpush.bf16.msra.mxu0 %v201
    %215 = vmatpush.bf16.msra.mxu0 %v200
    %216 = vmatpush.bf16.msra.mxu0 %v199
    %217 = vmatpush.bf16.msra.mxu0 %v198
    %218 = vmatmul.bf16.gmra.mxu0 %v208
    %v219 = vpop.f32.mrf.mxu0
    %v220 = vadd.f32 0.0, %v219
    %v221 = vpop.f32.mrf.mxu0
    %222 = vdwg.mxu0
    %vm223 = vcmp.gt.f32.partialorder %v220, 0.0
    %v224 = vmul.f32 %v220, 0.01
    %v225 = vsel %vm223, %v220, %v224
    %v226 = vpack.c.bf16 %v225, %v225
    %s227 = scalar_lea.vmem [#allocation2], 32
    %v228 = vld [vmem:[%s227] sm:$0xf]
    %v229 = vld [vmem:[%s227 + $0x4] sm:$0xf]
    %v230 = vld [vmem:[%s227 + $0x8] sm:$0xf]
    %v231 = vld [vmem:[%s227 + $0xc] sm:$0xf]
    %v232 = vld [vmem:[%s227 + $0x10] sm:$0xf]
    %v233 = vld [vmem:[%s227 + $0x14] sm:$0xf]
    %v234 = vld [vmem:[%s227 + $0x18] sm:$0xf]
    %v235 = vld [vmem:[%s227 + $0x1c] sm:$0xf]
    %v244 = vunpack.c.l.b16 %v228
    %v245 = vunpack.c.l.b16 %v229
    %v246 = vunpack.c.l.b16 %v230
    %v247 = vunpack.c.l.b16 %v231
    %v248 = vunpack.c.l.b16 %v232
    %v249 = vunpack.c.l.b16 %v233
    %v250 = vunpack.c.l.b16 %v234
    %v251 = vunpack.c.l.b16 %v235
    %v252 = vpack.c.b16 %v245, %v244
    %v253 = vpack.c.b16 %v247, %v246
    %v254 = vpack.c.b16 %v249, %v248
    %v255 = vpack.c.b16 %v251, %v250
    %v261 = vsel %vm206, %v226, 0
    %263 = vmatpush.bf16.msra.mxu0 0
    %264 = vmatpush.bf16.msra.mxu0 0
    %265 = vmatpush.bf16.msra.mxu0 0
    %266 = vmatpush.bf16.msra.mxu0 0
    %267 = vmatpush.bf16.msra.mxu0 %v255
    %268 = vmatpush.bf16.msra.mxu0 %v254
    %269 = vmatpush.bf16.msra.mxu0 %v253
    %270 = vmatpush.bf16.msra.mxu0 %v252
    %271 = vmatmul.bf16.gmra.mxu0 %v261
    %v272 = vpop.f32.mrf.mxu0
    %v273 = vadd.f32 0.0, %v272
    %v274 = vpop.f32.mrf.mxu0
    %275 = vdwg.mxu0
    %vm276 = vcmp.gt.f32.partialorder %v273, 0.0
    %v277 = vmul.f32 %v273, 0.01
    %v278 = vsel %vm276, %v273, %v277
    %v279 = vpack.c.bf16 %v278, %v278
    %s280 = scalar_lea.vmem [#allocation2], 64
    %v281 = vld [vmem:[%s280] sm:$0xf]
    %v282 = vld [vmem:[%s280 + $0x4] sm:$0xf]
    %v283 = vld [vmem:[%s280 + $0x8] sm:$0xf]
    %v284 = vld [vmem:[%s280 + $0xc] sm:$0xf]
    %v285 = vld [vmem:[%s280 + $0x10] sm:$0xf]
    %v286 = vld [vmem:[%s280 + $0x14] sm:$0xf]
    %v287 = vld [vmem:[%s280 + $0x18] sm:$0xf]
    %v288 = vld [vmem:[%s280 + $0x1c] sm:$0xf]
    %v297 = vunpack.c.l.b16 %v281
    %v298 = vunpack.c.l.b16 %v282
    %v299 = vunpack.c.l.b16 %v283
    %v300 = vunpack.c.l.b16 %v284
    %v301 = vunpack.c.l.b16 %v285
    %v302 = vunpack.c.l.b16 %v286
    %v303 = vunpack.c.l.b16 %v287
    %v304 = vunpack.c.l.b16 %v288
    %v305 = vpack.c.b16 %v298, %v297
    %v306 = vpack.c.b16 %v300, %v299
    %v307 = vpack.c.b16 %v302, %v301
    %v308 = vpack.c.b16 %v304, %v303
    %v314 = vsel %vm206, %v279, 0
    %316 = vmatpush.bf16.msra.mxu0 0
    %317 = vmatpush.bf16.msra.mxu0 0
    %318 = vmatpush.bf16.msra.mxu0 0
    %319 = vmatpush.bf16.msra.mxu0 0
    %320 = vmatpush.bf16.msra.mxu0 %v308
    %321 = vmatpush.bf16.msra.mxu0 %v307
    %322 = vmatpush.bf16.msra.mxu0 %v306
    %323 = vmatpush.bf16.msra.mxu0 %v305
    %324 = vmatmul.bf16.gmra.mxu0 %v314
    %v325 = vpop.f32.mrf.mxu0
    %v326 = vadd.f32 0.0, %v325
    %v327 = vpop.f32.mrf.mxu0
    %328 = vdwg.mxu0
    %vm329 = vcmp.gt.f32.partialorder %v326, 0.0
    %v330 = vmul.f32 %v326, 0.01
    %v331 = vsel %vm329, %v326, %v330
    %v332 = vadd.f32 %v331, %v172
    %v333 = vpack.c.bf16 %v332, %v332
    %v334 = vld [vmem:[%s2] sm:$0xf]
    %v335 = vld [vmem:[%s2 + $0x4] sm:$0xf]
    %v338 = vunpack.c.l.b16 %v334
    %v339 = vunpack.c.l.b16 %v335
    %v340 = vpack.c.b16 %v339, %v338
    %v343 = vsel %vm167, %v333, 0
    %345 = vmatpush.bf16.msra.mxu0 0
    %346 = vmatpush.bf16.msra.mxu0 0
    %347 = vmatpush.bf16.msra.mxu0 0
    %348 = vmatpush.bf16.msra.mxu0 0
    %349 = vmatpush.bf16.msra.mxu0 0
    %350 = vmatpush.bf16.msra.mxu0 0
    %351 = vmatpush.bf16.msra.mxu0 0
    %352 = vmatpush.bf16.msra.mxu0 %v340
    %353 = vmatmul.bf16.gmra.mxu0 %v343
    %v354 = vpop.f32.mrf.mxu0
    %v355 = vadd.f32 0.0, %v354
    %v356 = vpop.f32.mrf.mxu0
    %357 = vdwg.mxu0
    %v358 = vpack.c.bf16 %v355, %v355
    %359 = vst [vmem:[#allocation5] sm:$0x1] %v358
    %v361 = vunpack.c.l.b16 %v333
    %v362 = vpack.c.b16 %v361, %v361
    %363 = vrot.lane.b32.xlu0 %v362, 112
    %v364 = vpop.permute.xlu0 %363
    %v366 = vsel %vm167, %v364, 0
    %368 = vmatpush.bf16.msra.mxu0 0
    %369 = vmatpush.bf16.msra.mxu0 0
    %370 = vmatpush.bf16.msra.mxu0 0
    %371 = vmatpush.bf16.msra.mxu0 0
    %372 = vmatpush.bf16.msra.mxu0 0
    %373 = vmatpush.bf16.msra.mxu0 0
    %374 = vmatpush.bf16.msra.mxu0 0
    %375 = vmatpush.bf16.msra.mxu0 %v340
    %376 = vmatmul.bf16.gmra.mxu0 %v366
    %v377 = vpop.f32.mrf.mxu0
    %v378 = vadd.f32 0.0, %v377
    %v379 = vpop.f32.mrf.mxu0
    %380 = vdwg.mxu0
    %v381 = vpack.c.bf16 %v378, %v378
    %382 = vst [vmem:[#allocation5 + $0x1] sm:$0x1] %v381
    %383 = vrot.lane.b32.xlu0 %v362, 96
    %v384 = vpop.permute.xlu0 %383
    %v386 = vsel %vm167, %v384, 0
    %388 = vmatpush.bf16.msra.mxu0 0
    %389 = vmatpush.bf16.msra.mxu0 0
    %390 = vmatpush.bf16.msra.mxu0 0
    %391 = vmatpush.bf16.msra.mxu0 0
    %392 = vmatpush.bf16.msra.mxu0 0
    %393 = vmatpush.bf16.msra.mxu0 0
    %394 = vmatpush.bf16.msra.mxu0 0
    %395 = vmatpush.bf16.msra.mxu0 %v340
    %396 = vmatmul.bf16.gmra.mxu0 %v386
    %v397 = vpop.f32.mrf.mxu0
    %v398 = vadd.f32 0.0, %v397
    %v399 = vpop.f32.mrf.mxu0
    %400 = vdwg.mxu0
    %v401 = vpack.c.bf16 %v398, %v398
    %402 = vst [vmem:[#allocation5 + $0x2] sm:$0x1] %v401
    %403 = vrot.lane.b32.xlu0 %v362, 80
    %v404 = vpop.permute.xlu0 %403
    %v406 = vsel %vm167, %v404, 0
    %408 = vmatpush.bf16.msra.mxu0 0
    %409 = vmatpush.bf16.msra.mxu0 0
    %410 = vmatpush.bf16.msra.mxu0 0
    %411 = vmatpush.bf16.msra.mxu0 0
    %412 = vmatpush.bf16.msra.mxu0 0
    %413 = vmatpush.bf16.msra.mxu0 0
    %414 = vmatpush.bf16.msra.mxu0 0
    %415 = vmatpush.bf16.msra.mxu0 %v340
    %416 = vmatmul.bf16.gmra.mxu0 %v406
    %v417 = vpop.f32.mrf.mxu0
    %v418 = vadd.f32 0.0, %v417
    %v419 = vpop.f32.mrf.mxu0
    %420 = vdwg.mxu0
    %v421 = vpack.c.bf16 %v418, %v418
    %422 = vst [vmem:[#allocation5 + $0x3] sm:$0x1] %v421
    // Predicated region
    $region22: #{tpu_custom_call.1} parent=1 // pred_check
      _
    $region23: #{tpu_custom_call.1} parent=1 // pred_check_branch
      %424 = sbr.rel (0) target = $region25
    $region24: #{tpu_custom_call.1} parent=1 // pred_region
      %426 = vsyncadd [#allocation4], 0
      %s428 = sshll.u32 [#allocation5], 4
      %s429 = int_to_ptr.vmem [resolvable:$true] %s428
      %s430 = sshll.u32 %s4, 4
      %s431 = int_to_ptr.hbm [resolvable:$true] %s430
      %433 = dma.vmem_to_hbm [thread:$0]  %s429, 64, %s431, [#allocation4]
    $region25: #{tpu_custom_call.1} parent=1 // pred_fallthru
      _
    // Predicated region
    $region26: #{tpu_custom_call.1} parent=1 // pred_check
      _
    $region27: #{tpu_custom_call.1} parent=1 // pred_check_branch
      %435 = sbr.rel (0) target = $region29
    $region28: #{tpu_custom_call.1} parent=1 // pred_region
      %437 = dma.done [#allocation4], 64
    $region29: #{tpu_custom_call.1} parent=1 // pred_fallthru
      _
    %438 = vsyncpa [#allocation3], 1
    %439 = vsyncpa [#allocation4], 1

</llo_original>
